<compile_context>
chip_gen: v7x
topology: tpu7x:2x2x1
jax: 0.10.0
libtpu: 0.0.40
codegen_flags: <defaults>
</compile_context>

<pallas_src>
import jax
import jax.numpy as jnp
from jax.experimental import pallas as pl
from jax.experimental.pallas import tpu as pltpu


_NEG_BIG = -1e30  # finite "minus infinity" for padded class columns


def _round_up(x, m):
    return ((x + m - 1) // m) * m


def _vmem_budget_bytes():
    """~75% of per-core VMEM (generation aware), capped at 100 MiB."""
    cap = None
    try:
        cap = getattr(pltpu.get_tpu_info(), "vmem_capacity_bytes", None)
    except Exception:
        cap = None
    if not cap:
        kind = ""
        try:
            kind = jax.devices()[0].device_kind.lower()
        except Exception:
            pass
        # v5e / v6e: 128 MiB per core; v7x (and unknown): assume 64 MiB.
        cap = (128 if ("v5" in kind or "v6" in kind) else 64) * 1024 * 1024
    return int(min(cap * 3 // 4, 100 * 1024 * 1024))


# --------------------------------------------------------------------------
# Kernels
# --------------------------------------------------------------------------
def _fused_kernel(x_ref, w_ref, b_ref, o_ref):
    """Path A: weight fully VMEM-resident, one dot + log-softmax per batch tile."""
    logits = jnp.dot(x_ref[...], w_ref[...],
                     preferred_element_type=jnp.float32) + b_ref[...]
    m = jnp.max(logits, axis=-1, keepdims=True)
    shifted = logits - m
    lse = jnp.log(jnp.sum(jnp.exp(shifted), axis=-1, keepdims=True))
    o_ref[...] = (shifted - lse).astype(o_ref.dtype)


def _ktiled_kernel(x_ref, w_ref, b_ref, o_ref):
    """Path B: K-tiled matmul accumulating straight into the resident f32 output."""
    k = pl.program_id(1)

    @pl.when(k == 0)
    def _():
        # Bias-init the accumulator (padded classes carry -1e30 -> auto-masked).
        o_ref[...] = jnp.broadcast_to(b_ref[...], o_ref.shape)

    o_ref[...] += jnp.dot(x_ref[...], w_ref[...],
                          preferred_element_type=jnp.float32)

    @pl.when(k == pl.num_programs(1) - 1)
    def _():
        logits = o_ref[...]
        m = jnp.max(logits, axis=-1, keepdims=True)
        shifted = logits - m
        lse = jnp.log(jnp.sum(jnp.exp(shifted), axis=-1, keepdims=True))
        o_ref[...] = shifted - lse


# --------------------------------------------------------------------------
# Wrapper
# --------------------------------------------------------------------------
def _pick_tiles(B, D, C, budget):
    C_pad = _round_up(C, 128)

    # Prefer larger K tiles (fewer grid steps) as long as padding stays <= ~25%.
    d128 = _round_up(D, 128)
    TILE_K = 128
    for tk in (512, 256):
        if _round_up(D, tk) <= (d128 * 5) // 4:
            TILE_K = tk
            break
    D_pad = _round_up(D, TILE_K)

    B8 = _round_up(B, 8)
    if B8 >= 512:
        TILE_B = 256
    elif B8 >= 256:
        TILE_B = 128
    elif B8 >= 16:
        TILE_B = _round_up((B8 + 1) // 2, 8)   # >=2 batch tiles -> both v7x TCs busy
    else:
        TILE_B = B8
    # Keep the resident (TILE_B, C_pad) f32 output block a small VMEM fraction.
    while TILE_B > 8 and 2 * TILE_B * C_pad * 4 > budget // 3:
        TILE_B = max(8, _round_up(TILE_B // 2, 8))

    return TILE_B, TILE_K, D_pad, C_pad


def prepare_params(weight, bias, d_pad, c_pad):
    """Pad + transpose the constant parameters once (cache this in a real model)."""
    C, D = weight.shape
    w_t = weight.T                                     # (D, C): canonical (K, N)
    if d_pad != D or c_pad != C:
        w_t = jnp.pad(w_t, ((0, d_pad - D), (0, c_pad - C)))
    b_p = bias
    if c_pad != C:
        # Huge negative bias on padded classes -> acts like -inf in log-softmax,
        # no in-kernel masking required.
        b_p = jnp.pad(bias, (0, c_pad - C), constant_values=_NEG_BIG)
    return w_t, b_p.reshape(1, c_pad)


def linear_logsoftmax(x, weight, bias):
    """y = log_softmax(x @ weight.T + bias, axis=1).

    x: (B, D) f32, weight: (C, D) f32 (PyTorch nn.Linear layout), bias: (C,) f32.
    """
    B, D = x.shape
    C = weight.shape[0]

    budget = _vmem_budget_bytes()
    TILE_B, TILE_K, D_pad, C_pad = _pick_tiles(B, D, C, budget)
    B_pad = _round_up(B, TILE_B)

    # Constant parameters: padded/transposed once, outside the per-call hot path.
    w_t, b_p = prepare_params(weight, bias, D_pad, C_pad)

    # Pad activations only when actually needed.
    if B_pad != B or D_pad != D:
        x = jnp.pad(x, ((0, B_pad - B), (0, D_pad - D)))

    cost = pl.CostEstimate(
        flops=2 * B * D * C,
        transcendentals=B * C + B,
        bytes_accessed=4 * (B * D + D * C + C + B * C),
    )

    # ---- Path A: whole weight fits VMEM -> constant index_map (DMA'd once),
    #      single dot per batch tile, no K axis, no accumulator logic. ----
    bytes_resident = 4 * (2 * TILE_B * D_pad      # x (double-buffered)
                          + 2 * D_pad * C_pad     # weight (counted 2x, safe)
                          + 2 * C_pad             # bias
                          + 2 * TILE_B * C_pad)   # output
    if bytes_resident <= budget:
        vmem_limit = int(min(budget, max(2 * bytes_resident, 16 * 1024 * 1024)))
        out = pl.pallas_call(
            _fused_kernel,
            out_shape=jax.ShapeDtypeStruct((B_pad, C_pad), jnp.float32),
            grid_spec=pltpu.PrefetchScalarGridSpec(
                num_scalar_prefetch=0,
                grid=(B_pad // TILE_B,),
                in_specs=[
                    pl.BlockSpec((TILE_B, D_pad), lambda i: (i, 0)),   # x tile
                    pl.BlockSpec((D_pad, C_pad), lambda i: (0, 0)),    # resident W^T
                    pl.BlockSpec((1, C_pad), lambda i: (0, 0)),        # bias
                ],
                out_specs=pl.BlockSpec((TILE_B, C_pad), lambda i: (i, 0)),
            ),
            compiler_params=pltpu.CompilerParams(
                dimension_semantics=("parallel",),
                vmem_limit_bytes=vmem_limit,
            ),
            cost_estimate=cost,
        )(x, w_t, b_p)
    else:
        # ---- Path B: K-tiled, accumulate directly into the resident f32 output. ----
        # TODO(synk): for very large nclass on v7x, add a class-tile grid axis with
        # an online (flash-style) log-sum-exp instead of holding full C_pad rows.
        bytes_tiled = 4 * (2 * TILE_B * TILE_K + 2 * TILE_K * C_pad
                           + 2 * C_pad + 2 * TILE_B * C_pad)
        vmem_limit = int(min(budget, max(2 * bytes_tiled, 16 * 1024 * 1024)))
        out = pl.pallas_call(
            _ktiled_kernel,
            out_shape=jax.ShapeDtypeStruct((B_pad, C_pad), jnp.float32),
            grid_spec=pltpu.PrefetchScalarGridSpec(
                num_scalar_prefetch=0,
                grid=(B_pad // TILE_B, D_pad // TILE_K),
                in_specs=[
                    pl.BlockSpec((TILE_B, TILE_K), lambda i, k: (i, k)),   # x tile
                    pl.BlockSpec((TILE_K, C_pad), lambda i, k: (k, 0)),    # W^T tile
                    pl.BlockSpec((1, C_pad), lambda i, k: (0, 0)),         # bias
                ],
                out_specs=pl.BlockSpec((TILE_B, C_pad), lambda i, k: (i, 0)),
            ),
            compiler_params=pltpu.CompilerParams(
                dimension_semantics=("parallel", "arbitrary"),
                vmem_limit_bytes=vmem_limit,
            ),
            cost_estimate=cost,
        )(x, w_t, b_p)

    return out[:B, :C]


if __name__ == "__main__":
    # Small shapes consistent with the module: batch=8, input_dim=32, nclass=16
    B, D, C = 8, 32, 16
    key = jax.random.PRNGKey(0)
    kx, kw, kb = jax.random.split(key, 3)

    x = jax.random.normal(kx, (B, D), dtype=jnp.float32)
    # Deterministic param init (mimic nn.Linear uniform(-1/sqrt(D), 1/sqrt(D)))
    bound = 1.0 / jnp.sqrt(jnp.float32(D))
    weight = jax.random.uniform(kw, (C, D), minval=-bound, maxval=bound,
                                dtype=jnp.float32)
    bias = jax.random.uniform(kb, (C,), minval=-bound, maxval=bound,
                              dtype=jnp.float32)

    out = linear_logsoftmax(x, weight, bias)
    jax.block_until_ready(out)

    # Reference check (plain JAX)
    ref = jax.nn.log_softmax(x @ weight.T + bias, axis=1)
    assert out.shape == ref.shape, "shape mismatch vs reference"
    assert jnp.allclose(out, ref, atol=1e-5, rtol=1e-5), "mismatch vs reference"
    print("KERNEL_OK")
</pallas_src>

<mosaic_0001>
module attributes {stable_mosaic.version = 11 : i64} {
  func.func @_fused_kernel(%arg0: i32, %arg1: memref<8x128xf32, #tpu.memory_space<vmem>>, %arg2: memref<128x128xf32, #tpu.memory_space<vmem>>, %arg3: memref<1x128xf32, #tpu.memory_space<vmem>>, %arg4: memref<8x128xf32, #tpu.memory_space<vmem>>) attributes {dimension_semantics = [#tpu.dimension_semantics<parallel>], iteration_bounds = array<i64: 1>, scalar_prefetch = 0 : i64, scratch_operands = 0 : i64, tpu.core_type = #tpu.core_type<tc>, window_params = [{transform_indices = @transform_0, window_bounds = array<i64: 8, 128>}, {pipeline_mode = #tpu.pipeline_mode<synchronous>, transform_indices = @transform_1, window_bounds = array<i64: 128, 128>}, {pipeline_mode = #tpu.pipeline_mode<synchronous>, transform_indices = @transform_2, window_bounds = array<i64: 1, 128>}, {transform_indices = @transform_3, window_bounds = array<i64: 8, 128>}]} {
    %c0 = arith.constant 0 : index
    %c0_0 = arith.constant 0 : index
    %0 = vector.load %arg1[%c0, %c0_0] : memref<8x128xf32, #tpu.memory_space<vmem>>, vector<8x128xf32>
    %c0_1 = arith.constant 0 : index
    %c0_2 = arith.constant 0 : index
    %1 = vector.load %arg2[%c0_1, %c0_2] : memref<128x128xf32, #tpu.memory_space<vmem>>, vector<128x128xf32>
    %cst = arith.constant dense<0.000000e+00> : vector<8x128xf32>
    %2 = tpu.matmul %0, %1, %cst {dimension_numbers = #tpu.dot_dimension_numbers<[1], [0], [0], [1], [0, 0, 1, 1], [], []>} : vector<8x128xf32>, vector<128x128xf32>, vector<8x128xf32> -> vector<8x128xf32>
    %c0_3 = arith.constant 0 : index
    %c0_4 = arith.constant 0 : index
    %3 = vector.load %arg3[%c0_3, %c0_4] : memref<1x128xf32, #tpu.memory_space<vmem>>, vector<1x128xf32>
    %4 = vector.broadcast %3 : vector<1x128xf32> to vector<8x128xf32>
    %5 = arith.addf %2, %4 : vector<8x128xf32>
    %cst_5 = arith.constant dense<0xFF800000> : vector<8xf32>
    %6 = vector.multi_reduction <maximumf>, %5, %cst_5 [1] : vector<8x128xf32> to vector<8xf32>
    %7 = vector.shape_cast %6 : vector<8xf32> to vector<8x1xf32>
    %8 = vector.broadcast %7 : vector<8x1xf32> to vector<8x128xf32>
    %9 = arith.subf %5, %8 : vector<8x128xf32>
    %10 = math.exp %9 : vector<8x128xf32>
    %cst_6 = arith.constant dense<0.000000e+00> : vector<8xf32>
    %11 = vector.multi_reduction <add>, %10, %cst_6 [1] : vector<8x128xf32> to vector<8xf32>
    %12 = vector.shape_cast %11 : vector<8xf32> to vector<8x1xf32>
    %13 = math.log %12 : vector<8x1xf32>
    %14 = vector.broadcast %13 : vector<8x1xf32> to vector<8x128xf32>
    %15 = arith.subf %9, %14 : vector<8x128xf32>
    %c0_7 = arith.constant 0 : index
    %c0_8 = arith.constant 0 : index
    %16 = vector.load %arg4[%c0_7, %c0_8] : memref<8x128xf32, #tpu.memory_space<vmem>>, vector<8x128xf32>
    tpu.vector_store %arg4[%c0_7, %c0_8], %15 {strides = array<i32>} : memref<8x128xf32, #tpu.memory_space<vmem>>, vector<8x128xf32>,
    return
  }
  func.func @transform_0(%arg0: i32) -> (i32, i32) {
    %c0_i32 = arith.constant 0 : i32
    %c0_i32_0 = arith.constant 0 : i32
    return %arg0, %c0_i32 : i32, i32
  }
  func.func @transform_1(%arg0: i32) -> (i32, i32) {
    %c0_i32 = arith.constant 0 : i32
    %c0_i32_0 = arith.constant 0 : i32
    %c0_i32_1 = arith.constant 0 : i32
    return %c0_i32, %c0_i32_0 : i32, i32
  }
  func.func @transform_2(%arg0: i32) -> (i32, i32) {
    %c0_i32 = arith.constant 0 : i32
    %c0_i32_0 = arith.constant 0 : i32
    %c0_i32_1 = arith.constant 0 : i32
    return %c0_i32, %c0_i32_0 : i32, i32
  }
  func.func @transform_3(%arg0: i32) -> (i32, i32) {
    %c0_i32 = arith.constant 0 : i32
    %c0_i32_0 = arith.constant 0 : i32
    return %arg0, %c0_i32 : i32, i32
  }
}

</mosaic_0001>

<llo_original>
// kernel: tpu_custom_call.1
$region0: #{tpu_custom_call.1}
  #allocation0 [shape = 'u32[]', space=smem, size = 0x4, offset = 0x4, fixed_abs, tag = 'smem constant byte address 0x4 - core index']
  #allocation1 [shape = 'u32[144,128]{1,0:T(1,128)}', space=vmem, size = 0x12000, scoped, tag = 'internal scratch']
  %s0 = inlined_call_operand.hbm [shape: f32[8,128], index: 0, kind: input, shape index: {}]
  %s1 = inlined_call_operand.hbm [shape: f32[128,128], index: 1, kind: input, shape index: {}]
  %s2 = inlined_call_operand.vmem [shape: f32[1,128], index: 2, kind: input, shape index: {}]
  %s3 = inlined_call_operand.hbm [shape: f32[8,128], index: 3, kind: output, shape index: {}]
  %s4 = sld [smem:[#allocation0]]
  $region30: #{tpu_custom_call.1} parent=0
    _
  %s6 = ssub.s32 1, %s4
  %s7 = scalar_select 0, %s6, %s4
  $region1: #{tpu_custom_call.1} parent=0
    #allocation2 [shape = 'u8[4096]{0}', space=vmem, size = 0x1000, scoped, tag = 'input window, operand 0, single buffered']
    #allocation3 [shape = 's32[1]{0}', space=sflag, size = 0x4, scoped, tag = 'scoped memory for tpu_custom_call.1']
    #allocation4 [shape = 's32[1]{0}', space=sflag, size = 0x4, scoped, tag = 'scoped memory for tpu_custom_call.1']
    #allocation5 [shape = 'u8[65536]{0}', space=vmem, size = 0x10000, scoped, tag = 'input window, operand 1, single buffered']
    #allocation6 [shape = 's32[1]{0}', space=sflag, size = 0x4, scoped, tag = 'scoped memory for tpu_custom_call.1']
    #allocation7 [shape = 'u8[4096]{0}', space=vmem, size = 0x1000, scoped, tag = 'output window, operand 0, single buffered']
    %8 = vsyncpa [#allocation3], 0
    %9 = vsyncpa [#allocation6], 0
    %10 = vsyncpa [#allocation4], 0
    // Predicated region
    $region2: #{tpu_custom_call.1} parent=1 // pred_check
      _
    $region3: #{tpu_custom_call.1} parent=1 // pred_check_branch
      %12 = sbr.rel (0) target = $region5
    $region4: #{tpu_custom_call.1} parent=1 // pred_region
      %s14 = ssub.s32 128, 128
      %15 = vsyncadd [#allocation3], %s14
      %s17 = sshll.u32 [#allocation2], 4
      %s18 = int_to_ptr.vmem [resolvable:$true] %s17
      %20 = dma.hbm_to_vmem [thread:$0]  %s0, 128, %s18, [#allocation3]
    $region5: #{tpu_custom_call.1} parent=1 // pred_fallthru
      _
    // Predicated region
    $region6: #{tpu_custom_call.1} parent=1 // pred_check
      _
    $region7: #{tpu_custom_call.1} parent=1 // pred_check_branch
      %22 = sbr.rel (0) target = $region9
    $region8: #{tpu_custom_call.1} parent=1 // pred_region
      %s24 = ssub.s32 2048, 2048
      %25 = vsyncadd [#allocation6], %s24
      %s26 = sshll.u32 [#allocation5], 4
      %s27 = int_to_ptr.vmem [resolvable:$true] %s26
      %32 = dma.hbm_to_vmem [thread:$0]  %s1, 2048, %s27, [#allocation6], 128, 128, 8
    $region9: #{tpu_custom_call.1} parent=1 // pred_fallthru
      _
    // Predicated region
    $region10: #{tpu_custom_call.1} parent=1 // pred_check
      _
    $region11: #{tpu_custom_call.1} parent=1 // pred_check_branch
      %34 = sbr.rel (0) target = $region13
    $region12: #{tpu_custom_call.1} parent=1 // pred_region
      _
    $region13: #{tpu_custom_call.1} parent=1 // pred_fallthru
      _
    // Predicated region
    $region14: #{tpu_custom_call.1} parent=1 // pred_check
      _
    $region15: #{tpu_custom_call.1} parent=1 // pred_check_branch
      %36 = sbr.rel (0) target = $region17
    $region16: #{tpu_custom_call.1} parent=1 // pred_region
      %37 = dma.done [#allocation3], 128
    $region17: #{tpu_custom_call.1} parent=1 // pred_fallthru
      _
    // Predicated region
    $region18: #{tpu_custom_call.1} parent=1 // pred_check
      _
    $region19: #{tpu_custom_call.1} parent=1 // pred_check_branch
      %39 = sbr.rel (0) target = $region21
    $region20: #{tpu_custom_call.1} parent=1 // pred_region
      %40 = dma.done [#allocation6], 2048
    $region21: #{tpu_custom_call.1} parent=1 // pred_fallthru
      _
    %v41 = vld [vmem:[#allocation2] sm:$0xff]
    %v42 = vld [vmem:[#allocation5] sm:$0xff]
    %v43 = vld [vmem:[#allocation5 + $0x8] sm:$0xff]
    %v44 = vld [vmem:[#allocation5 + $0x10] sm:$0xff]
    %v45 = vld [vmem:[#allocation5 + $0x18] sm:$0xff]
    %v46 = vld [vmem:[#allocation5 + $0x20] sm:$0xff]
    %v47 = vld [vmem:[#allocation5 + $0x28] sm:$0xff]
    %v48 = vld [vmem:[#allocation5 + $0x30] sm:$0xff]
    %v49 = vld [vmem:[#allocation5 + $0x38] sm:$0xff]
    %v50 = vld [vmem:[#allocation5 + $0x40] sm:$0xff]
    %v51 = vld [vmem:[#allocation5 + $0x48] sm:$0xff]
    %v52 = vld [vmem:[#allocation5 + $0x50] sm:$0xff]
    %v53 = vld [vmem:[#allocation5 + $0x58] sm:$0xff]
    %v54 = vld [vmem:[#allocation5 + $0x60] sm:$0xff]
    %v55 = vld [vmem:[#allocation5 + $0x68] sm:$0xff]
    %v56 = vld [vmem:[#allocation5 + $0x70] sm:$0xff]
    %v57 = vld [vmem:[#allocation5 + $0x78] sm:$0xff]
    %v58 = vld [vmem:[%s2] sm:$0x1]
    %v60 = vlaneseq
    %v61 = vshrl.u32 %v60, 7
    %v62 = vsub.s32 0, %v61
    %v63 = vrot.slane %v58, %v62
    %65 = vmatprep.subr.mxu0 0.0
    %66 = vmatpush1.msra.mxu0 %v42
    %67 = vmatprep.subr.mxu0 0.0
    %68 = vmatpush1.msra.mxu0 %v43
    %69 = vmatprep.subr.mxu0 0.0
    %70 = vmatpush1.msra.mxu0 %v44
    %71 = vmatprep.subr.mxu0 0.0
    %72 = vmatpush1.msra.mxu0 %v45
    %73 = vmatprep.subr.mxu0 0.0
    %74 = vmatpush1.msra.mxu0 %v46
    %75 = vmatprep.subr.mxu0 0.0
    %76 = vmatpush1.msra.mxu0 %v47
    %77 = vmatprep.subr.mxu0 0.0
    %78 = vmatpush1.msra.mxu0 %v48
    %79 = vmatprep.subr.mxu0 0.0
    %80 = vmatpush1.msra.mxu0 %v49
    %81 = vmatprep.subr.mxu0 0.0
    %82 = vmatpush1.msra.mxu0 %v50
    %83 = vmatprep.subr.mxu0 0.0
    %84 = vmatpush1.msra.mxu0 %v51
    %85 = vmatprep.subr.mxu0 0.0
    %86 = vmatpush1.msra.mxu0 %v52
    %87 = vmatprep.subr.mxu0 0.0
    %88 = vmatpush1.msra.mxu0 %v53
    %89 = vmatprep.subr.mxu0 0.0
    %90 = vmatpush1.msra.mxu0 %v54
    %91 = vmatprep.subr.mxu0 0.0
    %92 = vmatpush1.msra.mxu0 %v55
    %93 = vmatprep.subr.mxu0 0.0
    %94 = vmatpush1.msra.mxu0 %v56
    %95 = vmatprep.subr.mxu0 0.0
    %96 = vmatpush1.msra.mxu0 %v57
    %97 = vmatprep.subr.mxu0 0.0
    %98 = vmatpush1.msra.mxu0 0.0
    %99 = vmatprep.subr.mxu0 0.0
    %100 = vmatpush1.msra.mxu0 0.0
    %101 = vmatprep.subr.mxu0 0.0
    %102 = vmatpush1.msra.mxu0 0.0
    %103 = vmatprep.subr.mxu0 0.0
    %104 = vmatpush1.msra.mxu0 0.0
    %105 = vmatprep.subr.mxu0 0.0
    %106 = vmatpush1.msra.mxu0 0.0
    %107 = vmatprep.subr.mxu0 0.0
    %108 = vmatpush1.msra.mxu0 0.0
    %109 = vmatprep.subr.mxu0 0.0
    %110 = vmatpush1.msra.mxu0 0.0
    %111 = vmatprep.subr.mxu0 0.0
    %112 = vmatpush1.msra.mxu0 0.0
    %113 = vmatprep.subr.mxu0 0.0
    %114 = vmatpush1.msra.mxu0 0.0
    %115 = vmatprep.subr.mxu0 0.0
    %116 = vmatpush1.msra.mxu0 0.0
    %117 = vmatprep.subr.mxu0 0.0
    %118 = vmatpush1.msra.mxu0 0.0
    %119 = vmatprep.subr.mxu0 0.0
    %120 = vmatpush1.msra.mxu0 0.0
    %121 = vmatprep.subr.mxu0 0.0
    %122 = vmatpush1.msra.mxu0 0.0
    %123 = vmatprep.subr.mxu0 0.0
    %124 = vmatpush1.msra.mxu0 0.0
    %125 = vmatprep.subr.mxu0 0.0
    %126 = vmatpush1.msra.mxu0 0.0
    %127 = vmatprep.subr.mxu0 0.0
    %128 = vmatpush1.msra.mxu0 0.0
    %129 = vmatprep.mubr.f32.mxu0 0.0
    %130 = vmatmul.mubr.f32.gmra.mrb[0].mxu0 %v41
    %v131 = vpop.f32.mrb[0].mxu0
    %v132 = vadd.f32 %v63, %v131
    %v133 = vpop.f32.mrb[0].mxu0
    %134 = vdwg.mxu0
    %135 = vmax.xlane.f32.xlu0 %v132
    %v136 = vpop.xlane.xlu0 %135
    %v137 = vsub.f32 %v132, %v136
    %v138 = vmul.f32 %v137, 1.442695
    %v139 = vpow.pop %v138
    %140 = vadd.xlane.f32.xlu0 %v139
    %v141 = vpop.xlane.xlu0 %140
    %v142 = vlog2.pop %v141
    %v143 = vmul.f32 %v142, 0.6931472
    %v144 = vsub.f32 %v137, %v143
    %145 = vst [vmem:[#allocation7] sm:$0xff] %v144
    // Predicated region
    $region22: #{tpu_custom_call.1} parent=1 // pred_check
      _
    $region23: #{tpu_custom_call.1} parent=1 // pred_check_branch
      %147 = sbr.rel (0) target = $region25
    $region24: #{tpu_custom_call.1} parent=1 // pred_region
      %s149 = ssub.s32 128, 128
      %150 = vsyncadd [#allocation4], %s149
      %s152 = sshll.u32 [#allocation7], 4
      %s153 = int_to_ptr.vmem [resolvable:$true] %s152
      %155 = dma.vmem_to_hbm [thread:$0]  %s153, 128, %s3, [#allocation4]
    $region25: #{tpu_custom_call.1} parent=1 // pred_fallthru
      _
    // Predicated region
    $region26: #{tpu_custom_call.1} parent=1 // pred_check
      _
    $region27: #{tpu_custom_call.1} parent=1 // pred_check_branch
      %157 = sbr.rel (0) target = $region29
    $region28: #{tpu_custom_call.1} parent=1 // pred_region
      %158 = dma.done [#allocation4], 128
    $region29: #{tpu_custom_call.1} parent=1 // pred_fallthru
      _
    %159 = vsyncpa [#allocation3], 1
    %160 = vsyncpa [#allocation6], 1
    %161 = vsyncpa [#allocation4], 1

</llo_original>
